<compile_context>
chip_gen: v5e
topology: v5e:2x2
jax: 0.10.0
libtpu: 0.0.40
codegen_flags: <defaults>
</compile_context>

<pallas_src>
import jax
import jax.numpy as jnp
from jax.experimental import pallas as pl
from jax.experimental.pallas import tpu as pltpu

LOWER, UPPER = -12.85, 3.59


def normalize_and_clip(data, lower=LOWER, upper=UPPER, to_one=True, scale=1.0):
    """JAX port of the reference normalize_and_clip (setup-time glue)."""
    data = jnp.clip(data, lower, upper)
    if to_one:
        return (data - lower) / (upper - lower) * scale
    return data - lower


def _blend_kernel(fg_ref, bg_ref, alpha_ref, out_ref):
    # fg_ref, bg_ref: (C, TS); alpha_ref: (TN, TS); out_ref: (TN, C, TS)
    fg = fg_ref[...]
    bg = bg_ref[...]
    a = alpha_ref[...]
    diff = fg - bg                      # computed once, reused for all TN labels
    out_ref[...] = bg[None, :, :] + a[:, None, :] * diff[None, :, :]


def peekaboo_forward(foreground, background, alphas, *,
                     max_spatial_tile=16384, max_labels_per_step=8):
    """Equivalent of PeekabooSegmenter.forward(alphas=alphas).

    foreground, background: (C, H, W) float32
    alphas:                 (N, H, W) float32
    returns:                (N, C, H, W) float32
    """
    assert foreground.shape == background.shape
    C, H, W = foreground.shape
    N = alphas.shape[0]
    assert alphas.shape == (N, H, W)

    HW = H * W
    fg2 = foreground.reshape(C, HW)
    bg2 = background.reshape(C, HW)
    al2 = alphas.reshape(N, HW)

    # Lane (spatial) tile: full extent when small or not 128-aligned, otherwise
    # a large multiple of 128 (trailing partial block is masked automatically).
    if HW <= max_spatial_tile or (HW % 128) != 0:
        ts = HW
    else:
        ts = max_spatial_tile

    # Labels per step: full N when small (no leftover sublane padding), else 8.
    tn = N if N <= max_labels_per_step else max_labels_per_step

    grid = (pl.cdiv(N, tn), pl.cdiv(HW, ts))

    out_flat = pl.pallas_call(
        _blend_kernel,
        out_shape=jax.ShapeDtypeStruct((N, C, HW), foreground.dtype),
        grid=grid,
        in_specs=[
            pl.BlockSpec((C, ts), lambda n, s: (0, s)),    # foreground (shared across labels)
            pl.BlockSpec((C, ts), lambda n, s: (0, s)),    # background (shared across labels)
            pl.BlockSpec((tn, ts), lambda n, s: (n, s)),   # TN alphas per step
        ],
        out_specs=pl.BlockSpec((tn, C, ts), lambda n, s: (n, 0, s)),
        compiler_params=pltpu.CompilerParams(
            dimension_semantics=("parallel", "parallel"),
            vmem_limit_bytes=32 * 1024 * 1024,
        ),
    )(fg2, bg2, al2)

    return out_flat.reshape(N, C, H, W)


if __name__ == "__main__":
    key = jax.random.PRNGKey(0)
    k_mel, k_alpha = jax.random.split(key)

    # Small shapes consistent with the module:
    #   target_length (H) = 16, mel_channel (W) = 128, C = 3 ('h w -> c h w' repeat),
    #   num_labels (N) = 2
    H, W, C, N = 16, 128, 3, 2

    # Synthetic mel "audio" tensor of shape (1, 1, H, W), values ~ N(-4.63, 2.74)
    # to match the documented mel statistics.
    mel = jax.random.normal(k_mel, (1, 1, H, W), dtype=jnp.float32) * 2.74 - 4.63

    # __init__-style setup: foreground = normalize_and_clip(repeat(mel[0,0], c=3), to_one=False)
    chw = jnp.broadcast_to(mel[0, 0][None, :, :], (C, H, W))
    foreground = normalize_and_clip(chw, to_one=False)
    background = jnp.zeros_like(foreground)

    # TODO(synk): LearnableImageFourier / LearnableImageRaster source is not provided;
    # alphas are supplied explicitly via forward(alphas=...) as deterministic values in [0, 1].
    alphas = jax.nn.sigmoid(jax.random.normal(k_alpha, (N, H, W), dtype=jnp.float32))

    out = peekaboo_forward(foreground, background, alphas)
    out = jax.block_until_ready(out)

    # Reference check against plain-JAX semantics of the PyTorch forward.
    ref = foreground[None] * alphas[:, None] + background[None] * (1.0 - alphas[:, None])
    assert out.shape == (N, C, H, W), out.shape
    assert out.dtype == jnp.float32
    assert jnp.allclose(out, ref, atol=1e-5), float(jnp.max(jnp.abs(out - ref)))

    print("KERNEL_OK")
</pallas_src>

<mosaic_0001>
module attributes {stable_mosaic.version = 11 : i64} {
  func.func @_blend_kernel(%arg0: i32, %arg1: i32, %arg2: memref<3x2048xf32, #tpu.memory_space<vmem>>, %arg3: memref<3x2048xf32, #tpu.memory_space<vmem>>, %arg4: memref<2x2048xf32, #tpu.memory_space<vmem>>, %arg5: memref<2x3x2048xf32, #tpu.memory_space<vmem>>) attributes {dimension_semantics = [#tpu.dimension_semantics<parallel>, #tpu.dimension_semantics<parallel>], iteration_bounds = array<i64: 1, 1>, scalar_prefetch = 0 : i64, scratch_operands = 0 : i64, tpu.core_type = #tpu.core_type<tc>, window_params = [{transform_indices = @transform_0, window_bounds = array<i64: 3, 2048>}, {transform_indices = @transform_1, window_bounds = array<i64: 3, 2048>}, {transform_indices = @transform_2, window_bounds = array<i64: 2, 2048>}, {transform_indices = @transform_3, window_bounds = array<i64: 2, 3, 2048>}]} {
    %c0 = arith.constant 0 : index
    %c0_0 = arith.constant 0 : index
    %0 = vector.load %arg2[%c0, %c0_0] : memref<3x2048xf32, #tpu.memory_space<vmem>>, vector<3x2048xf32>
    %c0_1 = arith.constant 0 : index
    %c0_2 = arith.constant 0 : index
    %1 = vector.load %arg3[%c0_1, %c0_2] : memref<3x2048xf32, #tpu.memory_space<vmem>>, vector<3x2048xf32>
    %c0_3 = arith.constant 0 : index
    %c0_4 = arith.constant 0 : index
    %2 = vector.load %arg4[%c0_3, %c0_4] : memref<2x2048xf32, #tpu.memory_space<vmem>>, vector<2x2048xf32>
    %3 = arith.subf %0, %1 : vector<3x2048xf32>
    %4 = vector.shape_cast %1 : vector<3x2048xf32> to vector<1x3x2048xf32>
    %5 = vector.shape_cast %2 : vector<2x2048xf32> to vector<2x1x2048xf32>
    %6 = vector.shape_cast %3 : vector<3x2048xf32> to vector<1x3x2048xf32>
    %7 = vector.broadcast %5 : vector<2x1x2048xf32> to vector<2x3x2048xf32>
    %8 = vector.broadcast %6 : vector<1x3x2048xf32> to vector<2x3x2048xf32>
    %9 = arith.mulf %7, %8 : vector<2x3x2048xf32>
    %10 = vector.broadcast %4 : vector<1x3x2048xf32> to vector<2x3x2048xf32>
    %11 = arith.addf %10, %9 : vector<2x3x2048xf32>
    %c0_5 = arith.constant 0 : index
    %c0_6 = arith.constant 0 : index
    %c0_7 = arith.constant 0 : index
    %12 = vector.load %arg5[%c0_5, %c0_6, %c0_7] : memref<2x3x2048xf32, #tpu.memory_space<vmem>>, vector<2x3x2048xf32>
    tpu.vector_store %arg5[%c0_5, %c0_6, %c0_7], %11 {strides = array<i32>} : memref<2x3x2048xf32, #tpu.memory_space<vmem>>, vector<2x3x2048xf32>,
    return
  }
  func.func @transform_0(%arg0: i32, %arg1: i32) -> (i32, i32) {
    %c0_i32 = arith.constant 0 : i32
    %c0_i32_0 = arith.constant 0 : i32
    return %c0_i32, %arg1 : i32, i32
  }
  func.func @transform_1(%arg0: i32, %arg1: i32) -> (i32, i32) {
    %c0_i32 = arith.constant 0 : i32
    %c0_i32_0 = arith.constant 0 : i32
    return %c0_i32, %arg1 : i32, i32
  }
  func.func @transform_2(%arg0: i32, %arg1: i32) -> (i32, i32) {
    %c0_i32 = arith.constant 0 : i32
    return %arg0, %arg1 : i32, i32
  }
  func.func @transform_3(%arg0: i32, %arg1: i32) -> (i32, i32, i32) {
    %c0_i32 = arith.constant 0 : i32
    %c0_i32_0 = arith.constant 0 : i32
    return %arg0, %c0_i32, %arg1 : i32, i32, i32
  }
}

</mosaic_0001>

<llo_original>
// kernel: tpu_custom_call.1
$region0: #{tpu_custom_call.1}
  #allocation0 [shape = 'u32[]', space=smem, size = 0x4, offset = 0x4, fixed_abs, tag = 'smem constant byte address 0x4 - core index']
  #allocation1 [shape = 'u32[72,128]{1,0:T(1,128)}', space=vmem, size = 0x9000, scoped, tag = 'internal scratch']
  %s0 = inlined_call_operand.hbm [shape: f32[3,2048], index: 0, kind: input, shape index: {}]
  %s1 = inlined_call_operand.hbm [shape: f32[3,2048], index: 1, kind: input, shape index: {}]
  %s2 = inlined_call_operand.hbm [shape: f32[2,2048], index: 2, kind: input, shape index: {}]
  %s3 = inlined_call_operand.vmem [shape: f32[2,3,2048], index: 3, kind: output, shape index: {}]
  %s4 = sld [smem:[#allocation0]]
  $region34: #{tpu_custom_call.1} parent=0
    _
  %s6 = ssub.s32 1, %s4
  %s7 = scalar_select 0, %s6, %s4
  $region1: #{tpu_custom_call.1} parent=0
    #allocation2 [shape = 'u8[32768]{0}', space=vmem, size = 0x8000, scoped, tag = 'input window, operand 0, single buffered']
    #allocation3 [shape = 's32[1]{0}', space=sflag, size = 0x4, scoped, tag = 'scoped memory for tpu_custom_call.1']
    #allocation4 [shape = 'u8[32768]{0}', space=vmem, size = 0x8000, scoped, tag = 'input window, operand 1, single buffered']
    #allocation5 [shape = 's32[1]{0}', space=sflag, size = 0x4, scoped, tag = 'scoped memory for tpu_custom_call.1']
    #allocation6 [shape = 'u8[16384]{0}', space=vmem, size = 0x4000, scoped, tag = 'input window, operand 2, single buffered']
    %8 = vsyncpa [#allocation3], 0
    %9 = vsyncpa [#allocation5], 0
    // Predicated region
    $region2: #{tpu_custom_call.1} parent=1 // pred_check
      _
    $region3: #{tpu_custom_call.1} parent=1 // pred_check_branch
      %11 = sbr.rel (0) target = $region5
    $region4: #{tpu_custom_call.1} parent=1 // pred_region
      %13 = vsyncadd [#allocation3], 0
      %s15 = sshll.u32 %s0, 4
      %s16 = int_to_ptr.hbm [resolvable:$true] %s15
      %s17 = sshll.u32 [#allocation2], 4
      %s18 = int_to_ptr.vmem [resolvable:$true] %s17
      %20 = dma.hbm_to_vmem [thread:$0]  %s16, 1024, %s18, [#allocation3]
    $region5: #{tpu_custom_call.1} parent=1 // pred_fallthru
      _
    // Predicated region
    $region6: #{tpu_custom_call.1} parent=1 // pred_check
      _
    $region7: #{tpu_custom_call.1} parent=1 // pred_check_branch
      %22 = sbr.rel (0) target = $region9
    $region8: #{tpu_custom_call.1} parent=1 // pred_region
      %24 = vsyncadd [#allocation5], 0
      %s26 = sshll.u32 %s1, 4
      %s27 = int_to_ptr.hbm [resolvable:$true] %s26
      %s28 = sshll.u32 [#allocation4], 4
      %s29 = int_to_ptr.vmem [resolvable:$true] %s28
      %31 = dma.hbm_to_vmem [thread:$0]  %s27, 1024, %s29, [#allocation5]
    $region9: #{tpu_custom_call.1} parent=1 // pred_fallthru
      _
    // Predicated region
    $region10: #{tpu_custom_call.1} parent=1 // pred_check
      _
    $region11: #{tpu_custom_call.1} parent=1 // pred_check_branch
      %33 = sbr.rel (0) target = $region13
    $region12: #{tpu_custom_call.1} parent=1 // pred_region
      %35 = vsyncadd [#allocation5], 0
      %s37 = sshll.u32 %s2, 4
      %s38 = int_to_ptr.hbm [resolvable:$true] %s37
      %s39 = sshll.u32 [#allocation6], 4
      %s40 = int_to_ptr.vmem [resolvable:$true] %s39
      %42 = dma.hbm_to_vmem [thread:$0]  %s38, 512, %s40, [#allocation5]
    $region13: #{tpu_custom_call.1} parent=1 // pred_fallthru
      _
    // Predicated region
    $region14: #{tpu_custom_call.1} parent=1 // pred_check
      _
    $region15: #{tpu_custom_call.1} parent=1 // pred_check_branch
      %44 = sbr.rel (0) target = $region17
    $region16: #{tpu_custom_call.1} parent=1 // pred_region
      %46 = dma.done [#allocation3], 1024
    $region17: #{tpu_custom_call.1} parent=1 // pred_fallthru
      _
    // Predicated region
    $region18: #{tpu_custom_call.1} parent=1 // pred_check
      _
    $region19: #{tpu_custom_call.1} parent=1 // pred_check_branch
      %48 = sbr.rel (0) target = $region21
    $region20: #{tpu_custom_call.1} parent=1 // pred_region
      %50 = dma.done [#allocation5], 1024
    $region21: #{tpu_custom_call.1} parent=1 // pred_fallthru
      _
    // Predicated region
    $region22: #{tpu_custom_call.1} parent=1 // pred_check
      _
    $region23: #{tpu_custom_call.1} parent=1 // pred_check_branch
      %52 = sbr.rel (0) target = $region25
    $region24: #{tpu_custom_call.1} parent=1 // pred_region
      %54 = dma.done [#allocation5], 512
    $region25: #{tpu_custom_call.1} parent=1 // pred_fallthru
      _
    %v55 = vld [vmem:[#allocation2] sm:$0x77]
    %v56 = vld [vmem:[#allocation2 + $0x8] sm:$0x77]
    %v57 = vld [vmem:[#allocation2 + $0x10] sm:$0x77]
    %v58 = vld [vmem:[#allocation2 + $0x18] sm:$0x77]
    %v59 = vld [vmem:[#allocation2 + $0x20] sm:$0x77]
    %v60 = vld [vmem:[#allocation2 + $0x28] sm:$0x77]
    %v61 = vld [vmem:[#allocation2 + $0x30] sm:$0x77]
    %v62 = vld [vmem:[#allocation2 + $0x38] sm:$0x77]
    %v63 = vld [vmem:[#allocation4] sm:$0x77]
    %v64 = vld [vmem:[#allocation4 + $0x8] sm:$0x77]
    %v65 = vld [vmem:[#allocation4 + $0x10] sm:$0x77]
    %v66 = vld [vmem:[#allocation4 + $0x18] sm:$0x77]
    %v67 = vld [vmem:[#allocation4 + $0x20] sm:$0x77]
    %v68 = vld [vmem:[#allocation4 + $0x28] sm:$0x77]
    %v69 = vld [vmem:[#allocation4 + $0x30] sm:$0x77]
    %v70 = vld [vmem:[#allocation4 + $0x38] sm:$0x77]
    %v71 = vld [vmem:[#allocation6] sm:$0xff]
    %v72 = vld [vmem:[#allocation6 + $0x8] sm:$0xff]
    %v73 = vld [vmem:[#allocation6 + $0x10] sm:$0xff]
    %v74 = vld [vmem:[#allocation6 + $0x18] sm:$0xff]
    %v75 = vsub.f32 %v55, %v63
    %v76 = vsub.f32 %v56, %v64
    %v77 = vsub.f32 %v57, %v65
    %v78 = vsub.f32 %v58, %v66
    %v79 = vsub.f32 %v59, %v67
    %v80 = vsub.f32 %v60, %v68
    %v81 = vsub.f32 %v61, %v69
    %v82 = vsub.f32 %v62, %v70
    %v87 = vrot.slane %v71, 1
    %v88 = vrot.slane %v71, 2
    %v89 = vrot.slane %v71, 3
    %v90 = vrot.slane %v72, 4
    %v91 = vrot.slane %v72, 5
    %v92 = vrot.slane %v72, 6
    %v93 = vrot.slane %v72, 7
    %v94 = vrot.slane %v73, 1
    %v95 = vrot.slane %v73, 2
    %v96 = vrot.slane %v73, 3
    %v97 = vrot.slane %v74, 4
    %v98 = vrot.slane %v74, 5
    %v99 = vrot.slane %v74, 6
    %v100 = vrot.slane %v74, 7
    %vm101 = vcmask 1040384
    %v102 = vsel %vm101, %v71, %v87
    %vm103 = vcmask 1042434
    %v104 = vsel %vm103, %v88, %v89
    %vm105 = vcmask 1041408
    %v106 = vsel %vm105, %v102, %v104
    %vm107 = vcmask 1044484
    %v108 = vsel %vm107, %v90, %v91
    %vm109 = vcmask 1046534
    %v110 = vsel %vm109, %v92, %v93
    %vm111 = vcmask 1045508
    %v112 = vsel %vm111, %v108, %v110
    %vm113 = vcmask 1043456
    %v114 = vsel %vm113, %v106, %v112
    %v115 = vsel %vm101, %v73, %v94
    %v116 = vsel %vm103, %v95, %v96
    %v117 = vsel %vm105, %v115, %v116
    %v118 = vsel %vm107, %v97, %v98
    %v119 = vsel %vm109, %v99, %v100
    %v120 = vsel %vm111, %v118, %v119
    %v121 = vsel %vm113, %v117, %v120
    %vm122 = vcmask 1041409
    %v123 = vsel %vm122, %v71, %v87
    %vm124 = vcmask 1043459
    %v125 = vsel %vm124, %v88, %v89
    %vm126 = vcmask 1042433
    %v127 = vsel %vm126, %v123, %v125
    %vm128 = vcmask 1045509
    %v129 = vsel %vm128, %v90, %v91
    %vm130 = vcmask 1046528
    %v131 = vsel %vm130, %v93, %v92
    %vm132 = vcmask 1046533
    %v133 = vsel %vm132, %v129, %v131
    %vm134 = vcmask 1044481
    %v135 = vsel %vm134, %v127, %v133
    %v136 = vrot.slane %v135, 1
    %v137 = vsel %vm122, %v73, %v94
    %v138 = vsel %vm124, %v95, %v96
    %v139 = vsel %vm126, %v137, %v138
    %v140 = vsel %vm128, %v97, %v98
    %v141 = vsel %vm130, %v100, %v99
    %v142 = vsel %vm132, %v140, %v141
    %v143 = vsel %vm134, %v139, %v142
    %v144 = vrot.slane %v143, 1
    %v145 = vperm.slane %v114, 0
    %v146 = vperm.slane %v114, 1
    %v147 = vperm.slane %v114, 2
    %v148 = vperm.slane %v114, 3
    %v149 = vperm.slane %v114, 4
    %v150 = vperm.slane %v114, 5
    %v151 = vperm.slane %v114, 6
    %v152 = vperm.slane %v114, 7
    %v153 = vperm.slane %v121, 0
    %v154 = vperm.slane %v121, 1
    %v155 = vperm.slane %v121, 2
    %v156 = vperm.slane %v121, 3
    %v157 = vperm.slane %v121, 4
    %v158 = vperm.slane %v121, 5
    %v159 = vperm.slane %v121, 6
    %v160 = vperm.slane %v121, 7
    %v161 = vperm.slane %v136, 0
    %v162 = vperm.slane %v136, 1
    %v163 = vperm.slane %v136, 2
    %v164 = vperm.slane %v136, 3
    %v165 = vperm.slane %v136, 4
    %v166 = vperm.slane %v136, 5
    %v167 = vperm.slane %v136, 6
    %v168 = vperm.slane %v136, 7
    %v169 = vperm.slane %v144, 0
    %v170 = vperm.slane %v144, 1
    %v171 = vperm.slane %v144, 2
    %v172 = vperm.slane %v144, 3
    %v173 = vperm.slane %v144, 4
    %v174 = vperm.slane %v144, 5
    %v175 = vperm.slane %v144, 6
    %v176 = vperm.slane %v144, 7
    %217 = vst [vmem:[#allocation1] ss:$2 sm:$0xff] %v75
    %s218 = scalar_lea.vmem [#allocation1], 16
    %219 = vst [vmem:[%s218] ss:$2 sm:$0xff] %v76
    %s220 = scalar_lea.vmem [#allocation1], 32
    %221 = vst [vmem:[%s220] ss:$2 sm:$0xff] %v77
    %s222 = scalar_lea.vmem [#allocation1], 48
    %223 = vst [vmem:[%s222] ss:$2 sm:$0xff] %v78
    %v224 = vld.sshfl [vmem:[#allocation1] sm:$0xff pattern:$0x75316420]
    %v225 = vld.sshfl [vmem:[#allocation1 + $0x8] sm:$0xff pattern:$0x75316420]
    %v226 = vld.sshfl [vmem:[#allocation1 + $0x10] sm:$0xff pattern:$0x75316420]
    %v227 = vld.sshfl [vmem:[#allocation1 + $0x18] sm:$0xff pattern:$0x75316420]
    %v228 = vld.sshfl [vmem:[#allocation1 + $0x20] sm:$0xff pattern:$0x75316420]
    %v229 = vld.sshfl [vmem:[#allocation1 + $0x28] sm:$0xff pattern:$0x75316420]
    %v230 = vld.sshfl [vmem:[#allocation1 + $0x30] sm:$0xff pattern:$0x75316420]
    %v231 = vld.sshfl [vmem:[#allocation1 + $0x38] sm:$0xff pattern:$0x75316420]
    %232 = vst [vmem:[#allocation1] ss:$2 sm:$0xff] %v79
    %233 = vst [vmem:[%s218] ss:$2 sm:$0xff] %v80
    %234 = vst [vmem:[%s220] ss:$2 sm:$0xff] %v81
    %235 = vst [vmem:[%s222] ss:$2 sm:$0xff] %v82
    %v236 = vld.sshfl [vmem:[#allocation1] sm:$0xff pattern:$0x75316420]
    %v237 = vld.sshfl [vmem:[#allocation1 + $0x8] sm:$0xff pattern:$0x75316420]
    %v238 = vld.sshfl [vmem:[#allocation1 + $0x10] sm:$0xff pattern:$0x75316420]
    %v239 = vld.sshfl [vmem:[#allocation1 + $0x18] sm:$0xff pattern:$0x75316420]
    %v240 = vld.sshfl [vmem:[#allocation1 + $0x20] sm:$0xff pattern:$0x75316420]
    %v241 = vld.sshfl [vmem:[#allocation1 + $0x28] sm:$0xff pattern:$0x75316420]
    %v242 = vld.sshfl [vmem:[#allocation1 + $0x30] sm:$0xff pattern:$0x75316420]
    %v243 = vld.sshfl [vmem:[#allocation1 + $0x38] sm:$0xff pattern:$0x75316420]
    %244 = vst [vmem:[#allocation1] ss:$2 sm:$0xff] %v75
    %245 = vst [vmem:[%s218] ss:$2 sm:$0xff] %v76
    %246 = vst [vmem:[%s220] ss:$2 sm:$0xff] %v77
    %247 = vst [vmem:[%s222] ss:$2 sm:$0xff] %v78
    %v248 = vld.sshfl [vmem:[#allocation1] sm:$0xff pattern:$0x75316420]
    %v249 = vld.sshfl [vmem:[#allocation1 + $0x8] sm:$0xff pattern:$0x75316420]
    %v250 = vld.sshfl [vmem:[#allocation1 + $0x10] sm:$0xff pattern:$0x75316420]
    %v251 = vld.sshfl [vmem:[#allocation1 + $0x18] sm:$0xff pattern:$0x75316420]
    %v252 = vld.sshfl [vmem:[#allocation1 + $0x20] sm:$0xff pattern:$0x75316420]
    %v253 = vld.sshfl [vmem:[#allocation1 + $0x28] sm:$0xff pattern:$0x75316420]
    %v254 = vld.sshfl [vmem:[#allocation1 + $0x30] sm:$0xff pattern:$0x75316420]
    %v255 = vld.sshfl [vmem:[#allocation1 + $0x38] sm:$0xff pattern:$0x75316420]
    %256 = vst [vmem:[#allocation1] ss:$2 sm:$0xff] %v79
    %257 = vst [vmem:[%s218] ss:$2 sm:$0xff] %v80
    %258 = vst [vmem:[%s220] ss:$2 sm:$0xff] %v81
    %259 = vst [vmem:[%s222] ss:$2 sm:$0xff] %v82
    %v260 = vld.sshfl [vmem:[#allocation1] sm:$0xff pattern:$0x75316420]
    %v261 = vld.sshfl [vmem:[#allocation1 + $0x8] sm:$0xff pattern:$0x75316420]
    %v262 = vld.sshfl [vmem:[#allocation1 + $0x10] sm:$0xff pattern:$0x75316420]
    %v263 = vld.sshfl [vmem:[#allocation1 + $0x18] sm:$0xff pattern:$0x75316420]
    %v264 = vld.sshfl [vmem:[#allocation1 + $0x20] sm:$0xff pattern:$0x75316420]
    %v265 = vld.sshfl [vmem:[#allocation1 + $0x28] sm:$0xff pattern:$0x75316420]
    %v266 = vld.sshfl [vmem:[#allocation1 + $0x30] sm:$0xff pattern:$0x75316420]
    %v267 = vld.sshfl [vmem:[#allocation1 + $0x38] sm:$0xff pattern:$0x75316420]
    %v300 = vmul.f32 %v145, %v224
    %v301 = vmul.f32 %v146, %v225
    %v302 = vmul.f32 %v147, %v226
    %v303 = vmul.f32 %v148, %v227
    %v304 = vmul.f32 %v149, %v228
    %v305 = vmul.f32 %v150, %v229
    %v306 = vmul.f32 %v151, %v230
    %v307 = vmul.f32 %v152, %v231
    %v308 = vmul.f32 %v153, %v236
    %v309 = vmul.f32 %v154, %v237
    %v310 = vmul.f32 %v155, %v238
    %v311 = vmul.f32 %v156, %v239
    %v312 = vmul.f32 %v157, %v240
    %v313 = vmul.f32 %v158, %v241
    %v314 = vmul.f32 %v159, %v242
    %v315 = vmul.f32 %v160, %v243
    %v316 = vmul.f32 %v161, %v248
    %v317 = vmul.f32 %v162, %v249
    %v318 = vmul.f32 %v163, %v250
    %v319 = vmul.f32 %v164, %v251
    %v320 = vmul.f32 %v165, %v252
    %v321 = vmul.f32 %v166, %v253
    %v322 = vmul.f32 %v167, %v254
    %v323 = vmul.f32 %v168, %v255
    %v324 = vmul.f32 %v169, %v260
    %v325 = vmul.f32 %v170, %v261
    %v326 = vmul.f32 %v171, %v262
    %v327 = vmul.f32 %v172, %v263
    %v328 = vmul.f32 %v173, %v264
    %v329 = vmul.f32 %v174, %v265
    %v330 = vmul.f32 %v175, %v266
    %v331 = vmul.f32 %v176, %v267
    %v364 = vrot.slane %v301, 4
    %v365 = vrot.slane %v303, 4
    %v366 = vrot.slane %v305, 4
    %v367 = vrot.slane %v307, 4
    %v368 = vrot.slane %v309, 4
    %v369 = vrot.slane %v311, 4
    %v370 = vrot.slane %v313, 4
    %v371 = vrot.slane %v315, 4
    %v372 = vrot.slane %v317, 4
    %v373 = vrot.slane %v319, 4
    %v374 = vrot.slane %v321, 4
    %v375 = vrot.slane %v323, 4
    %v376 = vrot.slane %v325, 4
    %v377 = vrot.slane %v327, 4
    %v378 = vrot.slane %v329, 4
    %v379 = vrot.slane %v331, 4
    %v380 = vsel %vm113, %v300, %v364
    %v381 = vsel %vm113, %v302, %v365
    %v382 = vsel %vm113, %v304, %v366
    %v383 = vsel %vm113, %v306, %v367
    %v384 = vsel %vm113, %v308, %v368
    %v385 = vsel %vm113, %v310, %v369
    %v386 = vsel %vm113, %v312, %v370
    %v387 = vsel %vm113, %v314, %v371
    %v388 = vsel %vm113, %v316, %v372
    %v389 = vsel %vm113, %v318, %v373
    %v390 = vsel %vm113, %v320, %v374
    %v391 = vsel %vm113, %v322, %v375
    %v392 = vsel %vm113, %v324, %v376
    %v393 = vsel %vm113, %v326, %v377
    %v394 = vsel %vm113, %v328, %v378
    %v395 = vsel %vm113, %v330, %v379
    %v412 = vadd.f32 %v63, %v380
    %v413 = vadd.f32 %v64, %v381
    %v414 = vadd.f32 %v65, %v382
    %v415 = vadd.f32 %v66, %v383
    %v416 = vadd.f32 %v67, %v384
    %v417 = vadd.f32 %v68, %v385
    %v418 = vadd.f32 %v69, %v386
    %v419 = vadd.f32 %v70, %v387
    %v420 = vadd.f32 %v63, %v388
    %v421 = vadd.f32 %v64, %v389
    %v422 = vadd.f32 %v65, %v390
    %v423 = vadd.f32 %v66, %v391
    %v424 = vadd.f32 %v67, %v392
    %v425 = vadd.f32 %v68, %v393
    %v426 = vadd.f32 %v69, %v394
    %v427 = vadd.f32 %v70, %v395
    %428 = vst [vmem:[%s3] sm:$0x77] %v412
    %429 = vst [vmem:[%s3 + $0x8] sm:$0x77] %v413
    %430 = vst [vmem:[%s3 + $0x10] sm:$0x77] %v414
    %431 = vst [vmem:[%s3 + $0x18] sm:$0x77] %v415
    %432 = vst [vmem:[%s3 + $0x20] sm:$0x77] %v416
    %433 = vst [vmem:[%s3 + $0x28] sm:$0x77] %v417
    %434 = vst [vmem:[%s3 + $0x30] sm:$0x77] %v418
    %435 = vst [vmem:[%s3 + $0x38] sm:$0x77] %v419
    %436 = vst [vmem:[%s3 + $0x40] sm:$0x77] %v420
    %437 = vst [vmem:[%s3 + $0x48] sm:$0x77] %v421
    %438 = vst [vmem:[%s3 + $0x50] sm:$0x77] %v422
    %439 = vst [vmem:[%s3 + $0x58] sm:$0x77] %v423
    %440 = vst [vmem:[%s3 + $0x60] sm:$0x77] %v424
    %441 = vst [vmem:[%s3 + $0x68] sm:$0x77] %v425
    %442 = vst [vmem:[%s3 + $0x70] sm:$0x77] %v426
    %443 = vst [vmem:[%s3 + $0x78] sm:$0x77] %v427
    // Predicated region
    $region26: #{tpu_custom_call.1} parent=1 // pred_check
      _
    $region27: #{tpu_custom_call.1} parent=1 // pred_check_branch
      %445 = sbr.rel (0) target = $region29
    $region28: #{tpu_custom_call.1} parent=1 // pred_region
      _
    $region29: #{tpu_custom_call.1} parent=1 // pred_fallthru
      _
    // Predicated region
    $region30: #{tpu_custom_call.1} parent=1 // pred_check
      _
    $region31: #{tpu_custom_call.1} parent=1 // pred_check_branch
      %447 = sbr.rel (0) target = $region33
    $region32: #{tpu_custom_call.1} parent=1 // pred_region
      _
    $region33: #{tpu_custom_call.1} parent=1 // pred_fallthru
      _
    %448 = vsyncpa [#allocation3], 1
    %449 = vsyncpa [#allocation5], 1

</llo_original>
